<compile_context>
chip_gen: v7x
topology: tpu7x:2x2x1
jax: 0.10.0
libtpu: 0.0.40
codegen_flags: <defaults>
</compile_context>

<pallas_src>
import jax
import jax.numpy as jnp
from jax.experimental import pallas as pl
from jax.experimental.pallas import tpu as pltpu


def adapter_kernel(x_ref, wd_ref, bd_ref, wu_ref, bu_ref, o_ref):
    x = x_ref[...]                                                   # (TM, D)
    # down projection + bias (f32 accumulate on the MXU)
    down = jnp.dot(x, wd_ref[...], preferred_element_type=jnp.float32)
    down = down + bd_ref[...].astype(jnp.float32)                    # (TM, A) + (1, A)
    # ReLU in f32
    act = jnp.maximum(down, 0.0)
    # up projection + bias (cast activation to weight dtype at the dot boundary)
    up = jnp.dot(act.astype(wu_ref.dtype), wu_ref[...],
                 preferred_element_type=jnp.float32)
    up = up + bu_ref[...].astype(jnp.float32)                        # (TM, D) + (1, D)
    # residual add in f32, cast once on store
    o_ref[...] = (x.astype(jnp.float32) + up).astype(o_ref.dtype)


def _round_up(n, m):
    return ((n + m - 1) // m) * m


def _choose_tm(M, D, A, x_bytes, budget_bytes=28 * 1024 * 1024):
    """Largest row tile whose double-buffered x/out tiles + f32 intermediates
    fit a conservative VMEM budget (v7x-safe)."""
    m_aligned = max(8, _round_up(M, 8))
    for tm in (2048, 1024, 512, 256, 128, 64, 32, 16, 8):
        # 2x double-buffered x tiles + 2x out tiles + f32 (TM, A) and (TM, D) temps
        need = 4 * tm * D * x_bytes + 2 * tm * A * 4 + 2 * tm * D * 4
        if need <= budget_bytes:
            return min(tm, m_aligned)
    return min(8, m_aligned)


def adapter_forward(x, w_down, b_down, w_up, b_up):
    """x: (..., D). w_down: (D, A), b_down: (A,), w_up: (A, D), b_up: (D,)."""
    orig_shape = x.shape
    D = orig_shape[-1]
    A = w_down.shape[1]

    x2d = x.reshape(-1, D)
    M = x2d.shape[0]
    x_bytes = jnp.dtype(x.dtype).itemsize

    tm = _choose_tm(M, D, A, x_bytes)
    m_padded = _round_up(M, tm)
    if m_padded != M:
        x2d = jnp.pad(x2d, ((0, m_padded - M), (0, 0)))
    n_tiles = m_padded // tm

    bd = b_down.reshape(1, A)
    bu = b_up.reshape(1, D)

    w_bytes = (D * A + A * D) * jnp.dtype(w_down.dtype).itemsize \
        + (A + D) * jnp.dtype(b_down.dtype).itemsize
    cost = pl.CostEstimate(
        flops=4 * m_padded * D * A,
        transcendentals=0,
        bytes_accessed=2 * m_padded * D * x_bytes + w_bytes,
    )

    out = pl.pallas_call(
        adapter_kernel,
        out_shape=jax.ShapeDtypeStruct((m_padded, D), x.dtype),
        grid=(n_tiles,),
        in_specs=[
            pl.BlockSpec((tm, D), lambda i: (i, 0)),     # x: tiled over rows
            pl.BlockSpec((D, A), lambda i: (0, 0)),      # W_down: resident
            pl.BlockSpec((1, A), lambda i: (0, 0)),      # b_down: resident
            pl.BlockSpec((A, D), lambda i: (0, 0)),      # W_up: resident
            pl.BlockSpec((1, D), lambda i: (0, 0)),      # b_up: resident
        ],
        out_specs=pl.BlockSpec((tm, D), lambda i: (i, 0)),
        compiler_params=pltpu.CompilerParams(
            dimension_semantics=("parallel",),
            vmem_limit_bytes=64 * 1024 * 1024,
        ),
        cost_estimate=cost,
    )(x2d, w_down, bd, w_up, bu)

    if m_padded != M:
        out = out[:M]
    return out.reshape(orig_shape)


def adapter_reference(x, w_down, b_down, w_up, b_up):
    down = jnp.dot(x, w_down) + b_down
    act = jnp.maximum(down, 0.0)
    up = jnp.dot(act, w_up) + b_up
    return x + up


if __name__ == "__main__":
    # Small shapes consistent with the module: tokens of hidden size input_dim.
    # TODO(synk): for production hidden sizes not divisible by 128, pad D in the
    # wrapper for lane-dense stores; kept unpadded here since block == full dim.
    batch, seq, input_dim, adapter_dim = 2, 8, 32, 8

    key = jax.random.PRNGKey(0)
    kx, k1, k2, k3, k4 = jax.random.split(key, 5)

    x = jax.random.normal(kx, (batch, seq, input_dim), dtype=jnp.float32)

    # Deterministic init mimicking nn.Linear's uniform(-1/sqrt(fan_in), 1/sqrt(fan_in)).
    lim_d = 1.0 / jnp.sqrt(jnp.float32(input_dim))
    lim_u = 1.0 / jnp.sqrt(jnp.float32(adapter_dim))
    # Stored pre-transposed relative to PyTorch's (out, in) weight layout.
    w_down = jax.random.uniform(k1, (input_dim, adapter_dim),
                                minval=-lim_d, maxval=lim_d, dtype=jnp.float32)
    b_down = jax.random.uniform(k2, (adapter_dim,),
                                minval=-lim_d, maxval=lim_d, dtype=jnp.float32)
    w_up = jax.random.uniform(k3, (adapter_dim, input_dim),
                              minval=-lim_u, maxval=lim_u, dtype=jnp.float32)
    b_up = jax.random.uniform(k4, (input_dim,),
                              minval=-lim_u, maxval=lim_u, dtype=jnp.float32)

    out = adapter_forward(x, w_down, b_down, w_up, b_up)
    out = jax.block_until_ready(out)

    ref = adapter_reference(x, w_down, b_down, w_up, b_up)
    assert out.shape == x.shape
    assert jnp.allclose(out, ref, atol=1e-5, rtol=1e-5)

    print("KERNEL_OK")
</pallas_src>

<mosaic_0001>
module attributes {stable_mosaic.version = 11 : i64} {
  func.func @adapter_kernel(%arg0: i32, %arg1: memref<16x32xf32, #tpu.memory_space<vmem>>, %arg2: memref<32x8xf32, #tpu.memory_space<vmem>>, %arg3: memref<1x8xf32, #tpu.memory_space<vmem>>, %arg4: memref<8x32xf32, #tpu.memory_space<vmem>>, %arg5: memref<1x32xf32, #tpu.memory_space<vmem>>, %arg6: memref<16x32xf32, #tpu.memory_space<vmem>>) attributes {dimension_semantics = [#tpu.dimension_semantics<parallel>], iteration_bounds = array<i64: 1>, scalar_prefetch = 0 : i64, scratch_operands = 0 : i64, tpu.core_type = #tpu.core_type<tc>, window_params = [{transform_indices = @transform_0, window_bounds = array<i64: 16, 32>}, {pipeline_mode = #tpu.pipeline_mode<synchronous>, transform_indices = @transform_1, window_bounds = array<i64: 32, 8>}, {pipeline_mode = #tpu.pipeline_mode<synchronous>, transform_indices = @transform_2, window_bounds = array<i64: 1, 8>}, {pipeline_mode = #tpu.pipeline_mode<synchronous>, transform_indices = @transform_3, window_bounds = array<i64: 8, 32>}, {pipeline_mode = #tpu.pipeline_mode<synchronous>, transform_indices = @transform_4, window_bounds = array<i64: 1, 32>}, {transform_indices = @transform_5, window_bounds = array<i64: 16, 32>}]} {
    %c0 = arith.constant 0 : index
    %c0_0 = arith.constant 0 : index
    %0 = vector.load %arg1[%c0, %c0_0] : memref<16x32xf32, #tpu.memory_space<vmem>>, vector<16x32xf32>
    %c0_1 = arith.constant 0 : index
    %c0_2 = arith.constant 0 : index
    %1 = vector.load %arg2[%c0_1, %c0_2] : memref<32x8xf32, #tpu.memory_space<vmem>>, vector<32x8xf32>
    %cst = arith.constant dense<0.000000e+00> : vector<16x8xf32>
    %2 = tpu.matmul %0, %1, %cst {dimension_numbers = #tpu.dot_dimension_numbers<[1], [0], [0], [1], [0, 0, 1, 1], [], []>} : vector<16x32xf32>, vector<32x8xf32>, vector<16x8xf32> -> vector<16x8xf32>
    %c0_3 = arith.constant 0 : index
    %c0_4 = arith.constant 0 : index
    %3 = vector.load %arg3[%c0_3, %c0_4] : memref<1x8xf32, #tpu.memory_space<vmem>>, vector<1x8xf32>
    %4 = vector.broadcast %3 : vector<1x8xf32> to vector<16x8xf32>
    %5 = arith.addf %2, %4 : vector<16x8xf32>
    %cst_5 = arith.constant 0.000000e+00 : f32
    %6 = vector.broadcast %cst_5 : f32 to vector<16x8xf32>
    %7 = arith.maximumf %5, %6 : vector<16x8xf32>
    %c0_6 = arith.constant 0 : index
    %c0_7 = arith.constant 0 : index
    %8 = vector.load %arg4[%c0_6, %c0_7] : memref<8x32xf32, #tpu.memory_space<vmem>>, vector<8x32xf32>
    %cst_8 = arith.constant dense<0.000000e+00> : vector<16x32xf32>
    %9 = tpu.matmul %7, %8, %cst_8 {dimension_numbers = #tpu.dot_dimension_numbers<[1], [0], [0], [1], [0, 0, 1, 1], [], []>} : vector<16x8xf32>, vector<8x32xf32>, vector<16x32xf32> -> vector<16x32xf32>
    %c0_9 = arith.constant 0 : index
    %c0_10 = arith.constant 0 : index
    %10 = vector.load %arg5[%c0_9, %c0_10] : memref<1x32xf32, #tpu.memory_space<vmem>>, vector<1x32xf32>
    %11 = vector.broadcast %10 : vector<1x32xf32> to vector<16x32xf32>
    %12 = arith.addf %9, %11 : vector<16x32xf32>
    %13 = arith.addf %0, %12 : vector<16x32xf32>
    %c0_11 = arith.constant 0 : index
    %c0_12 = arith.constant 0 : index
    %14 = vector.load %arg6[%c0_11, %c0_12] : memref<16x32xf32, #tpu.memory_space<vmem>>, vector<16x32xf32>
    tpu.vector_store %arg6[%c0_11, %c0_12], %13 {strides = array<i32>} : memref<16x32xf32, #tpu.memory_space<vmem>>, vector<16x32xf32>,
    return
  }
  func.func @transform_0(%arg0: i32) -> (i32, i32) {
    %c0_i32 = arith.constant 0 : i32
    %c0_i32_0 = arith.constant 0 : i32
    return %arg0, %c0_i32 : i32, i32
  }
  func.func @transform_1(%arg0: i32) -> (i32, i32) {
    %c0_i32 = arith.constant 0 : i32
    %c0_i32_0 = arith.constant 0 : i32
    %c0_i32_1 = arith.constant 0 : i32
    return %c0_i32, %c0_i32_0 : i32, i32
  }
  func.func @transform_2(%arg0: i32) -> (i32, i32) {
    %c0_i32 = arith.constant 0 : i32
    %c0_i32_0 = arith.constant 0 : i32
    %c0_i32_1 = arith.constant 0 : i32
    return %c0_i32, %c0_i32_0 : i32, i32
  }
  func.func @transform_3(%arg0: i32) -> (i32, i32) {
    %c0_i32 = arith.constant 0 : i32
    %c0_i32_0 = arith.constant 0 : i32
    %c0_i32_1 = arith.constant 0 : i32
    return %c0_i32, %c0_i32_0 : i32, i32
  }
  func.func @transform_4(%arg0: i32) -> (i32, i32) {
    %c0_i32 = arith.constant 0 : i32
    %c0_i32_0 = arith.constant 0 : i32
    %c0_i32_1 = arith.constant 0 : i32
    return %c0_i32, %c0_i32_0 : i32, i32
  }
  func.func @transform_5(%arg0: i32) -> (i32, i32) {
    %c0_i32 = arith.constant 0 : i32
    %c0_i32_0 = arith.constant 0 : i32
    return %arg0, %c0_i32 : i32, i32
  }
}

</mosaic_0001>

<llo_original>
// kernel: tpu_custom_call.1
$region0: #{tpu_custom_call.1}
  #allocation0 [shape = 'u32[]', space=smem, size = 0x4, offset = 0x4, fixed_abs, tag = 'smem constant byte address 0x4 - core index']
  #allocation1 [shape = 'u32[144,128]{1,0:T(1,128)}', space=vmem, size = 0x12000, scoped, tag = 'internal scratch']
  %s0 = inlined_call_operand.hbm [shape: f32[16,32], index: 0, kind: input, shape index: {}]
  %s1 = inlined_call_operand.hbm [shape: f32[32,8], index: 1, kind: input, shape index: {}]
  %s2 = inlined_call_operand.hbm [shape: f32[1,8], index: 2, kind: input, shape index: {}]
  %s3 = inlined_call_operand.hbm [shape: f32[8,32], index: 3, kind: input, shape index: {}]
  %s4 = inlined_call_operand.hbm [shape: f32[1,32], index: 4, kind: input, shape index: {}]
  %s5 = inlined_call_operand.hbm [shape: f32[16,32], index: 5, kind: output, shape index: {}]
  %s6 = sld [smem:[#allocation0]]
  $region50: #{tpu_custom_call.1} parent=0
    _
  %s8 = ssub.s32 1, %s6
  %s9 = scalar_select 0, %s8, %s6
  $region1: #{tpu_custom_call.1} parent=0
    #allocation2 [shape = 'u8[8192]{0}', space=vmem, size = 0x2000, scoped, tag = 'input window, operand 0, single buffered']
    #allocation3 [shape = 's32[1]{0}', space=sflag, size = 0x4, scoped, tag = 'scoped memory for tpu_custom_call.1']
    #allocation4 [shape = 's32[1]{0}', space=sflag, size = 0x4, scoped, tag = 'scoped memory for tpu_custom_call.1']
    #allocation5 [shape = 'u8[16384]{0}', space=vmem, size = 0x4000, scoped, tag = 'input window, operand 1, single buffered']
    #allocation6 [shape = 's32[1]{0}', space=sflag, size = 0x4, scoped, tag = 'scoped memory for tpu_custom_call.1']
    #allocation7 [shape = 'u8[512]{0}', space=vmem, size = 0x400, scoped, tag = 'input window, operand 2, single buffered']
    #allocation8 [shape = 'u8[4096]{0}', space=vmem, size = 0x1000, scoped, tag = 'input window, operand 3, single buffered']
    #allocation9 [shape = 's32[1]{0}', space=sflag, size = 0x4, scoped, tag = 'scoped memory for tpu_custom_call.1']
    #allocation10 [shape = 'u8[512]{0}', space=vmem, size = 0x400, scoped, tag = 'input window, operand 4, single buffered']
    #allocation11 [shape = 'u8[8192]{0}', space=vmem, size = 0x2000, scoped, tag = 'output window, operand 0, single buffered']
    %10 = vsyncpa [#allocation3], 0
    %11 = vsyncpa [#allocation6], 0
    %12 = vsyncpa [#allocation9], 0
    %13 = vsyncpa [#allocation4], 0
    // Predicated region
    $region2: #{tpu_custom_call.1} parent=1 // pred_check
      _
    $region3: #{tpu_custom_call.1} parent=1 // pred_check_branch
      %15 = sbr.rel (0) target = $region5
    $region4: #{tpu_custom_call.1} parent=1 // pred_region
      %s17 = ssub.s32 256, 256
      %18 = vsyncadd [#allocation3], %s17
      %s19 = sshll.u32 [#allocation2], 4
      %s20 = int_to_ptr.vmem [resolvable:$true] %s19
      %25 = dma.hbm_to_vmem [thread:$0]  %s0, 256, %s20, [#allocation3], 128, 128, 8
    $region5: #{tpu_custom_call.1} parent=1 // pred_fallthru
      _
    // Predicated region
    $region6: #{tpu_custom_call.1} parent=1 // pred_check
      _
    $region7: #{tpu_custom_call.1} parent=1 // pred_check_branch
      %27 = sbr.rel (0) target = $region9
    $region8: #{tpu_custom_call.1} parent=1 // pred_region
      %s29 = ssub.s32 512, 512
      %30 = vsyncadd [#allocation6], %s29
      %s31 = sshll.u32 [#allocation5], 4
      %s32 = int_to_ptr.vmem [resolvable:$true] %s31
      %37 = dma.hbm_to_vmem [thread:$0]  %s1, 512, %s32, [#allocation6], 128, 128, 8
    $region9: #{tpu_custom_call.1} parent=1 // pred_fallthru
      _
    // Predicated region
    $region10: #{tpu_custom_call.1} parent=1 // pred_check
      _
    $region11: #{tpu_custom_call.1} parent=1 // pred_check_branch
      %39 = sbr.rel (0) target = $region13
    $region12: #{tpu_custom_call.1} parent=1 // pred_region
      %s41 = ssub.s32 16, 16
      %42 = vsyncadd [#allocation6], %s41
      %s44 = sshll.u32 [#allocation7], 4
      %s45 = int_to_ptr.vmem [resolvable:$true] %s44
      %47 = dma.hbm_to_vmem [thread:$0]  %s2, 16, %s45, [#allocation6]
    $region13: #{tpu_custom_call.1} parent=1 // pred_fallthru
      _
    // Predicated region
    $region14: #{tpu_custom_call.1} parent=1 // pred_check
      _
    $region15: #{tpu_custom_call.1} parent=1 // pred_check_branch
      %49 = sbr.rel (0) target = $region17
    $region16: #{tpu_custom_call.1} parent=1 // pred_region
      %s51 = ssub.s32 128, 128
      %52 = vsyncadd [#allocation9], %s51
      %s54 = sshll.u32 [#allocation8], 4
      %s55 = int_to_ptr.vmem [resolvable:$true] %s54
      %57 = dma.hbm_to_vmem [thread:$0]  %s3, 128, %s55, [#allocation9]
    $region17: #{tpu_custom_call.1} parent=1 // pred_fallthru
      _
    // Predicated region
    $region18: #{tpu_custom_call.1} parent=1 // pred_check
      _
    $region19: #{tpu_custom_call.1} parent=1 // pred_check_branch
      %59 = sbr.rel (0) target = $region21
    $region20: #{tpu_custom_call.1} parent=1 // pred_region
      %s61 = ssub.s32 16, 16
      %62 = vsyncadd [#allocation9], %s61
      %s64 = sshll.u32 [#allocation10], 4
      %s65 = int_to_ptr.vmem [resolvable:$true] %s64
      %67 = dma.hbm_to_vmem [thread:$0]  %s4, 16, %s65, [#allocation9]
    $region21: #{tpu_custom_call.1} parent=1 // pred_fallthru
      _
    // Predicated region
    $region22: #{tpu_custom_call.1} parent=1 // pred_check
      _
    $region23: #{tpu_custom_call.1} parent=1 // pred_check_branch
      %69 = sbr.rel (0) target = $region25
    $region24: #{tpu_custom_call.1} parent=1 // pred_region
      %70 = dma.done [#allocation3], 256
    $region25: #{tpu_custom_call.1} parent=1 // pred_fallthru
      _
    // Predicated region
    $region26: #{tpu_custom_call.1} parent=1 // pred_check
      _
    $region27: #{tpu_custom_call.1} parent=1 // pred_check_branch
      %72 = sbr.rel (0) target = $region29
    $region28: #{tpu_custom_call.1} parent=1 // pred_region
      %73 = dma.done [#allocation6], 512
    $region29: #{tpu_custom_call.1} parent=1 // pred_fallthru
      _
    // Predicated region
    $region30: #{tpu_custom_call.1} parent=1 // pred_check
      _
    $region31: #{tpu_custom_call.1} parent=1 // pred_check_branch
      %75 = sbr.rel (0) target = $region33
    $region32: #{tpu_custom_call.1} parent=1 // pred_region
      %76 = dma.done [#allocation6], 16
    $region33: #{tpu_custom_call.1} parent=1 // pred_fallthru
      _
    // Predicated region
    $region34: #{tpu_custom_call.1} parent=1 // pred_check
      _
    $region35: #{tpu_custom_call.1} parent=1 // pred_check_branch
      %78 = sbr.rel (0) target = $region37
    $region36: #{tpu_custom_call.1} parent=1 // pred_region
      %79 = dma.done [#allocation9], 128
    $region37: #{tpu_custom_call.1} parent=1 // pred_fallthru
      _
    // Predicated region
    $region38: #{tpu_custom_call.1} parent=1 // pred_check
      _
    $region39: #{tpu_custom_call.1} parent=1 // pred_check_branch
      %81 = sbr.rel (0) target = $region41
    $region40: #{tpu_custom_call.1} parent=1 // pred_region
      %82 = dma.done [#allocation9], 16
    $region41: #{tpu_custom_call.1} parent=1 // pred_fallthru
      _
    %v83 = vld [vmem:[#allocation2] sm:$0xff]
    %v84 = vld [vmem:[#allocation2 + $0x8] sm:$0xff]
    %v85 = vld [vmem:[#allocation5] sm:$0xff]
    %v86 = vld [vmem:[#allocation5 + $0x8] sm:$0xff]
    %v87 = vld [vmem:[#allocation5 + $0x10] sm:$0xff]
    %v88 = vld [vmem:[#allocation5 + $0x18] sm:$0xff]
    %v89 = vld [vmem:[#allocation7] sm:$0x1]
    %v91 = vlaneseq
    %v92 = vshrl.u32 %v91, 7
    %v93 = vsub.s32 0, %v92
    %v94 = vrot.slane %v89, %v93
    %vm96 = vcmask 261120
    %v98 = vsel %vm96, %v83, 0
    %v101 = vsel %vm96, %v84, 0
    %103 = vmatprep.subr.mxu0 0.0
    %104 = vmatpush1.msra.mxu0 %v85
    %105 = vmatprep.subr.mxu0 0.0
    %106 = vmatpush1.msra.mxu0 %v86
    %107 = vmatprep.subr.mxu0 0.0
    %108 = vmatpush1.msra.mxu0 %v87
    %109 = vmatprep.subr.mxu0 0.0
    %110 = vmatpush1.msra.mxu0 %v88
    %111 = vmatprep.subr.mxu0 0.0
    %112 = vmatpush1.msra.mxu0 0.0
    %113 = vmatprep.subr.mxu0 0.0
    %114 = vmatpush1.msra.mxu0 0.0
    %115 = vmatprep.subr.mxu0 0.0
    %116 = vmatpush1.msra.mxu0 0.0
    %117 = vmatprep.subr.mxu0 0.0
    %118 = vmatpush1.msra.mxu0 0.0
    %119 = vmatprep.subr.mxu0 0.0
    %120 = vmatpush1.msra.mxu0 0.0
    %121 = vmatprep.subr.mxu0 0.0
    %122 = vmatpush1.msra.mxu0 0.0
    %123 = vmatprep.subr.mxu0 0.0
    %124 = vmatpush1.msra.mxu0 0.0
    %125 = vmatprep.subr.mxu0 0.0
    %126 = vmatpush1.msra.mxu0 0.0
    %127 = vmatprep.subr.mxu0 0.0
    %128 = vmatpush1.msra.mxu0 0.0
    %129 = vmatprep.subr.mxu0 0.0
    %130 = vmatpush1.msra.mxu0 0.0
    %131 = vmatprep.subr.mxu0 0.0
    %132 = vmatpush1.msra.mxu0 0.0
    %133 = vmatprep.subr.mxu0 0.0
    %134 = vmatpush1.msra.mxu0 0.0
    %135 = vmatprep.subr.mxu0 0.0
    %136 = vmatpush1.msra.mxu0 0.0
    %137 = vmatprep.subr.mxu0 0.0
    %138 = vmatpush1.msra.mxu0 0.0
    %139 = vmatprep.subr.mxu0 0.0
    %140 = vmatpush1.msra.mxu0 0.0
    %141 = vmatprep.subr.mxu0 0.0
    %142 = vmatpush1.msra.mxu0 0.0
    %143 = vmatprep.subr.mxu0 0.0
    %144 = vmatpush1.msra.mxu0 0.0
    %145 = vmatprep.subr.mxu0 0.0
    %146 = vmatpush1.msra.mxu0 0.0
    %147 = vmatprep.subr.mxu0 0.0
    %148 = vmatpush1.msra.mxu0 0.0
    %149 = vmatprep.subr.mxu0 0.0
    %150 = vmatpush1.msra.mxu0 0.0
    %151 = vmatprep.subr.mxu0 0.0
    %152 = vmatpush1.msra.mxu0 0.0
    %153 = vmatprep.subr.mxu0 0.0
    %154 = vmatpush1.msra.mxu0 0.0
    %155 = vmatprep.subr.mxu0 0.0
    %156 = vmatpush1.msra.mxu0 0.0
    %157 = vmatprep.subr.mxu0 0.0
    %158 = vmatpush1.msra.mxu0 0.0
    %159 = vmatprep.subr.mxu0 0.0
    %160 = vmatpush1.msra.mxu0 0.0
    %161 = vmatprep.subr.mxu0 0.0
    %162 = vmatpush1.msra.mxu0 0.0
    %163 = vmatprep.subr.mxu0 0.0
    %164 = vmatpush1.msra.mxu0 0.0
    %165 = vmatprep.subr.mxu0 0.0
    %166 = vmatpush1.msra.mxu0 0.0
    %167 = vmatprep.mubr.f32.mxu0 0.0
    %168 = vmatmul.mubr.f32.gmra.mrb[0].mxu0 %v98
    %v169 = vpop.f32.mrb[0].mxu0
    %v170 = vadd.f32 %v94, %v169
    %v171 = vpop.f32.mrb[0].mxu0
    %172 = vmatprep.mubr.f32.mxu0 0.0
    %173 = vmatmul.mubr.f32.gmra.mrb[0].mxu0 %v101
    %v174 = vpop.f32.mrb[0].mxu0
    %v175 = vadd.f32 %v94, %v174
    %v176 = vpop.f32.mrb[0].mxu0
    %177 = vdwg.mxu0
    %v178 = vmax.f32 %v170, 0.0
    %v179 = vmax.f32 %v175, 0.0
    %v180 = vld [vmem:[#allocation8] sm:$0xff]
    %v181 = vld [vmem:[#allocation10] sm:$0x1]
    %v183 = vlaneseq
    %v184 = vshrl.u32 %v183, 7
    %v185 = vsub.s32 0, %v184
    %v186 = vrot.slane %v181, %v185
    %vm188 = vcmask 64512
    %v190 = vsel %vm188, %v178, 0
    %v193 = vsel %vm188, %v179, 0
    %195 = vmatprep.subr.mxu0 0.0
    %196 = vmatpush1.msra.mxu0 %v180
    %197 = vmatprep.subr.mxu0 0.0
    %198 = vmatpush1.msra.mxu0 0.0
    %199 = vmatprep.subr.mxu0 0.0
    %200 = vmatpush1.msra.mxu0 0.0
    %201 = vmatprep.subr.mxu0 0.0
    %202 = vmatpush1.msra.mxu0 0.0
    %203 = vmatprep.subr.mxu0 0.0
    %204 = vmatpush1.msra.mxu0 0.0
    %205 = vmatprep.subr.mxu0 0.0
    %206 = vmatpush1.msra.mxu0 0.0
    %207 = vmatprep.subr.mxu0 0.0
    %208 = vmatpush1.msra.mxu0 0.0
    %209 = vmatprep.subr.mxu0 0.0
    %210 = vmatpush1.msra.mxu0 0.0
    %211 = vmatprep.subr.mxu0 0.0
    %212 = vmatpush1.msra.mxu0 0.0
    %213 = vmatprep.subr.mxu0 0.0
    %214 = vmatpush1.msra.mxu0 0.0
    %215 = vmatprep.subr.mxu0 0.0
    %216 = vmatpush1.msra.mxu0 0.0
    %217 = vmatprep.subr.mxu0 0.0
    %218 = vmatpush1.msra.mxu0 0.0
    %219 = vmatprep.subr.mxu0 0.0
    %220 = vmatpush1.msra.mxu0 0.0
    %221 = vmatprep.subr.mxu0 0.0
    %222 = vmatpush1.msra.mxu0 0.0
    %223 = vmatprep.subr.mxu0 0.0
    %224 = vmatpush1.msra.mxu0 0.0
    %225 = vmatprep.subr.mxu0 0.0
    %226 = vmatpush1.msra.mxu0 0.0
    %227 = vmatprep.subr.mxu0 0.0
    %228 = vmatpush1.msra.mxu0 0.0
    %229 = vmatprep.subr.mxu0 0.0
    %230 = vmatpush1.msra.mxu0 0.0
    %231 = vmatprep.subr.mxu0 0.0
    %232 = vmatpush1.msra.mxu0 0.0
    %233 = vmatprep.subr.mxu0 0.0
    %234 = vmatpush1.msra.mxu0 0.0
    %235 = vmatprep.subr.mxu0 0.0
    %236 = vmatpush1.msra.mxu0 0.0
    %237 = vmatprep.subr.mxu0 0.0
    %238 = vmatpush1.msra.mxu0 0.0
    %239 = vmatprep.subr.mxu0 0.0
    %240 = vmatpush1.msra.mxu0 0.0
    %241 = vmatprep.subr.mxu0 0.0
    %242 = vmatpush1.msra.mxu0 0.0
    %243 = vmatprep.subr.mxu0 0.0
    %244 = vmatpush1.msra.mxu0 0.0
    %245 = vmatprep.subr.mxu0 0.0
    %246 = vmatpush1.msra.mxu0 0.0
    %247 = vmatprep.subr.mxu0 0.0
    %248 = vmatpush1.msra.mxu0 0.0
    %249 = vmatprep.subr.mxu0 0.0
    %250 = vmatpush1.msra.mxu0 0.0
    %251 = vmatprep.subr.mxu0 0.0
    %252 = vmatpush1.msra.mxu0 0.0
    %253 = vmatprep.subr.mxu0 0.0
    %254 = vmatpush1.msra.mxu0 0.0
    %255 = vmatprep.subr.mxu0 0.0
    %256 = vmatpush1.msra.mxu0 0.0
    %257 = vmatprep.subr.mxu0 0.0
    %258 = vmatpush1.msra.mxu0 0.0
    %259 = vmatprep.mubr.f32.mxu0 0.0
    %260 = vmatmul.mubr.f32.gmra.mrb[0].mxu0 %v190
    %v261 = vpop.f32.mrb[0].mxu0
    %v262 = vadd.f32 %v186, %v261
    %v263 = vpop.f32.mrb[0].mxu0
    %264 = vmatprep.mubr.f32.mxu0 0.0
    %265 = vmatmul.mubr.f32.gmra.mrb[0].mxu0 %v193
    %v266 = vpop.f32.mrb[0].mxu0
    %v267 = vadd.f32 %v186, %v266
    %v268 = vpop.f32.mrb[0].mxu0
    %269 = vdwg.mxu0
    %v270 = vadd.f32 %v83, %v262
    %v271 = vadd.f32 %v84, %v267
    %272 = vst.msk [vmem:[#allocation11] sm:$0xff] %vm96, %v270
    %273 = vst.msk [vmem:[#allocation11 + $0x8] sm:$0xff] %vm96, %v271
    // Predicated region
    $region42: #{tpu_custom_call.1} parent=1 // pred_check
      _
    $region43: #{tpu_custom_call.1} parent=1 // pred_check_branch
      %275 = sbr.rel (0) target = $region45
    $region44: #{tpu_custom_call.1} parent=1 // pred_region
      %s277 = ssub.s32 256, 256
      %278 = vsyncadd [#allocation4], %s277
      %s279 = sshll.u32 [#allocation11], 4
      %s280 = int_to_ptr.vmem [resolvable:$true] %s279
      %285 = dma.vmem_to_hbm [thread:$0]  %s280, 256, %s5, [#allocation4], 128, 128, 8
    $region45: #{tpu_custom_call.1} parent=1 // pred_fallthru
      _
    // Predicated region
    $region46: #{tpu_custom_call.1} parent=1 // pred_check
      _
    $region47: #{tpu_custom_call.1} parent=1 // pred_check_branch
      %287 = sbr.rel (0) target = $region49
    $region48: #{tpu_custom_call.1} parent=1 // pred_region
      %288 = dma.done [#allocation4], 256
    $region49: #{tpu_custom_call.1} parent=1 // pred_fallthru
      _
    %289 = vsyncpa [#allocation3], 1
    %290 = vsyncpa [#allocation6], 1
    %291 = vsyncpa [#allocation9], 1
    %292 = vsyncpa [#allocation4], 1

</llo_original>
